<compile_context>
chip_gen: v6e
topology: v6e:2x2x1
jax: 0.10.0
libtpu: 0.0.40
codegen_flags: <defaults>
</compile_context>

<pallas_src>
import jax
import jax.numpy as jnp
from jax.experimental import pallas as pl
from jax.experimental.pallas import tpu as pltpu


def _round_up(x, m):
    return ((x + m - 1) // m) * m


def _mean_agg_kernel(x_ref, w_ref, b_ref, out_ref):
    # x_ref  : (bn, O*F) lane-dense block of flattened instances (f32).
    # w_ref  : (O, O*F) closed-form context weights, resident in VMEM.
    # b_ref  : (1,) bias scalar in SMEM.
    # out_ref: (O, bn) transposed, lane-dense output block.
    #
    # ctx_T[i, b] = sum_k W_ctx[i, k] * x[b, k]  -- NT matmul (contract both
    # last dims), result lands directly in the lane-dense (O, bn) layout.
    ctx_t = jax.lax.dot_general(
        w_ref[...], x_ref[...],
        dimension_numbers=(((1,), (1,)), ((), ())),
        preferred_element_type=jnp.float32)
    out_ref[...] = (ctx_t + b_ref[0]).astype(out_ref.dtype)


def mean_aggregated_utility(instances, w_left, w_right, bias, *,
                            exclude_self_comparison=True,
                            max_block_instances=None):
    """instances: (N, O, F) -> aggregated object utilities (N, O) float32."""
    n, o, f = instances.shape
    of = o * f

    # Lane-dense slab: (N, O*F), contiguous per block in HBM.
    x2d = instances.astype(jnp.float32).reshape(n, of)

    # --- Block sizing ------------------------------------------------------
    # ~6 MiB of real f32 data per input block: double-buffered input (12 MiB)
    # + double-buffered (O, bn) output (<0.5 MiB) + resident W_ctx fits v5e's
    # 16 MiB scoped-VMEM default and leaves lots of headroom on v6e/v7x.
    bytes_per_row = of * 4
    bn_cap = (6 << 20) // max(bytes_per_row, 1)
    if max_block_instances is not None:
        bn_cap = min(bn_cap, max_block_instances)
    bn_cap = max(128, (bn_cap // 128) * 128)          # lane-multiple for out block

    # >= 2 blocks so the "parallel" grid axis feeds both v7x TensorCores;
    # bn derived from cdiv(n, num_blocks) so padding is at most 127 rows.
    num_blocks = max(2, pl.cdiv(n, bn_cap))
    bn = _round_up(pl.cdiv(n, num_blocks), 128)
    n_pad = num_blocks * bn
    if n_pad != n:
        x2d = jnp.pad(x2d, ((0, n_pad - n), (0, 0)))

    # --- Closed-form weight matrix (O, O*F), resident in VMEM --------------
    wl = jnp.ravel(w_left).astype(jnp.float32)
    wr = jnp.ravel(w_right).astype(jnp.float32)
    eye = jnp.eye(o, dtype=jnp.float32)
    if exclude_self_comparison:
        inv_div = 1.0 / max(o - 1, 1)                 # clamp guards O == 1
        mix = (1.0 - eye) * inv_div
    else:
        mix = jnp.full((o, o), 1.0 / o, dtype=jnp.float32)
    w_rows = (eye[:, :, None] * wl[None, None, :]
              + mix[:, :, None] * wr[None, None, :]).reshape(o, of)

    b = jnp.reshape(bias, (1,)).astype(jnp.float32)

    out_t = pl.pallas_call(
        _mean_agg_kernel,
        out_shape=jax.ShapeDtypeStruct((o, n_pad), jnp.float32),
        grid_spec=pltpu.PrefetchScalarGridSpec(
            num_scalar_prefetch=0,
            grid=(num_blocks,),
            in_specs=[
                pl.BlockSpec((bn, of), lambda i: (i, 0)),            # instances (lane-dense)
                pl.BlockSpec((o, of), lambda i: (0, 0)),             # W_ctx (resident)
                pl.BlockSpec(memory_space=pltpu.MemorySpace.SMEM),   # bias scalar
            ],
            out_specs=pl.BlockSpec((o, bn), lambda i: (0, i)),       # lane-dense output
        ),
        compiler_params=pltpu.CompilerParams(
            dimension_semantics=("parallel",)),
    )(x2d, w_rows, b)

    # (O, n_pad) -> (N, O); wrapper-side transpose of the small output only.
    return out_t[:, :n].T


def _reference(instances, w_left, w_right, bias, *, exclude_self_comparison=True):
    """Pure-JAX reference mirroring the PyTorch module: build the full pairwise
    utility matrix, zero the diagonal, then mean-aggregate."""
    n, o, f = instances.shape
    a = instances @ w_left            # (N, O)
    c = instances @ w_right           # (N, O)
    u = a[:, :, None] + c[:, None, :] + bias   # (N, O, O) pairwise utilities
    n_objects = o
    if exclude_self_comparison:
        eye = jnp.eye(o, dtype=bool)[None]
        u = jnp.where(eye, 0.0, u)
        n_objects -= 1
    return u.sum(-1) / n_objects


if __name__ == "__main__":
    key = jax.random.PRNGKey(0)
    k_x, k_w, k_b, k_x3 = jax.random.split(key, 4)

    N, O, F = 64, 8, 32
    instances = jax.random.normal(k_x, (N, O, F), dtype=jnp.float32)
    # Deterministic "first_order_utility" parameters: linear layer over [x_i; x_j].
    w = jax.random.normal(k_w, (2 * F,), dtype=jnp.float32) * 0.1
    w_left, w_right = w[:F], w[F:]
    bias = jax.random.normal(k_b, (), dtype=jnp.float32) * 0.1

    # Check 1: exclude-self aggregation.
    out = mean_aggregated_utility(instances, w_left, w_right, bias,
                                  exclude_self_comparison=True)
    out = jax.block_until_ready(out)
    ref = _reference(instances, w_left, w_right, bias,
                     exclude_self_comparison=True)
    assert out.shape == (N, O), out.shape
    assert jnp.allclose(out, ref, atol=1e-4, rtol=1e-4), (out, ref)

    # Check 2: include-self aggregation, forced small blocks -> multi-block
    # grid with row padding.
    N2 = 50
    inst2 = instances[:N2]
    out2 = mean_aggregated_utility(inst2, w_left, w_right, bias,
                                   exclude_self_comparison=False,
                                   max_block_instances=16)
    out2 = jax.block_until_ready(out2)
    ref2 = _reference(inst2, w_left, w_right, bias,
                      exclude_self_comparison=False)
    assert out2.shape == (N2, O), out2.shape
    assert jnp.allclose(out2, ref2, atol=1e-4, rtol=1e-4), (out2, ref2)

    # Check 3: default block heuristic with N not a block multiple
    # (exercises bn > 128 and padding slice-off).
    N3 = 300
    inst3 = jax.random.normal(k_x3, (N3, O, F), dtype=jnp.float32)
    out3 = mean_aggregated_utility(inst3, w_left, w_right, bias,
                                   exclude_self_comparison=True)
    out3 = jax.block_until_ready(out3)
    ref3 = _reference(inst3, w_left, w_right, bias,
                      exclude_self_comparison=True)
    assert out3.shape == (N3, O), out3.shape
    assert jnp.allclose(out3, ref3, atol=1e-4, rtol=1e-4), (out3, ref3)

    print("KERNEL_OK")
</pallas_src>

<mosaic_0001>
module attributes {stable_mosaic.version = 11 : i64} {
  func.func @_mean_agg_kernel(%arg0: i32, %arg1: memref<128x256xf32, #tpu.memory_space<vmem>>, %arg2: memref<8x256xf32, #tpu.memory_space<vmem>>, %arg3: memref<1xf32, #tpu.memory_space<smem>>, %arg4: memref<8x128xf32, #tpu.memory_space<vmem>>) attributes {dimension_semantics = [#tpu.dimension_semantics<parallel>], iteration_bounds = array<i64: 2>, scalar_prefetch = 0 : i64, scratch_operands = 0 : i64, tpu.core_type = #tpu.core_type<tc>, window_params = [{transform_indices = @transform_0, window_bounds = array<i64: 128, 256>}, {pipeline_mode = #tpu.pipeline_mode<synchronous>, transform_indices = @transform_1, window_bounds = array<i64: 8, 256>}, {transform_indices = @transform_2, window_bounds = array<i64: 1>}, {transform_indices = @transform_3, window_bounds = array<i64: 8, 128>}]} {
    %c0 = arith.constant 0 : index
    %c0_0 = arith.constant 0 : index
    %0 = vector.load %arg2[%c0, %c0_0] : memref<8x256xf32, #tpu.memory_space<vmem>>, vector<8x256xf32>
    %c0_1 = arith.constant 0 : index
    %c0_2 = arith.constant 0 : index
    %1 = vector.load %arg1[%c0_1, %c0_2] : memref<128x256xf32, #tpu.memory_space<vmem>>, vector<128x256xf32>
    %cst = arith.constant dense<0.000000e+00> : vector<8x128xf32>
    %2 = tpu.matmul %0, %1, %cst {dimension_numbers = #tpu.dot_dimension_numbers<[1], [1], [0], [0], [0, 0, 1, 0], [], []>} : vector<8x256xf32>, vector<128x256xf32>, vector<8x128xf32> -> vector<8x128xf32>
    %c0_3 = arith.constant 0 : index
    %3 = memref.load %arg3[%c0_3] : memref<1xf32, #tpu.memory_space<smem>>
    %4 = vector.broadcast %3 : f32 to vector<8x128xf32>
    %5 = arith.addf %2, %4 : vector<8x128xf32>
    %c0_4 = arith.constant 0 : index
    %c0_5 = arith.constant 0 : index
    %6 = vector.load %arg4[%c0_4, %c0_5] : memref<8x128xf32, #tpu.memory_space<vmem>>, vector<8x128xf32>
    tpu.vector_store %arg4[%c0_4, %c0_5], %5 {strides = array<i32>} : memref<8x128xf32, #tpu.memory_space<vmem>>, vector<8x128xf32>,
    return
  }
  func.func @transform_0(%arg0: i32) -> (i32, i32) {
    %c0_i32 = arith.constant 0 : i32
    %c0_i32_0 = arith.constant 0 : i32
    return %arg0, %c0_i32 : i32, i32
  }
  func.func @transform_1(%arg0: i32) -> (i32, i32) {
    %c0_i32 = arith.constant 0 : i32
    %c0_i32_0 = arith.constant 0 : i32
    %c0_i32_1 = arith.constant 0 : i32
    return %c0_i32, %c0_i32_0 : i32, i32
  }
  func.func @transform_2(%arg0: i32) -> i32 {
    %c0_i32 = arith.constant 0 : i32
    %c0_i32_0 = arith.constant 0 : i32
    return %c0_i32 : i32
  }
  func.func @transform_3(%arg0: i32) -> (i32, i32) {
    %c0_i32 = arith.constant 0 : i32
    %c0_i32_0 = arith.constant 0 : i32
    return %c0_i32, %arg0 : i32, i32
  }
}

</mosaic_0001>

<llo_original>
// kernel: tpu_custom_call.1
$region0: #{tpu_custom_call.1}
  #allocation0 [shape = 'u32[]', space=smem, size = 0x4, offset = 0x4, fixed_abs, tag = 'smem constant byte address 0x4 - core index']
  #allocation1 [shape = 'u32[144,128]{1,0:T(1,128)}', space=vmem, size = 0x12000, scoped, tag = 'internal scratch']
  #allocation2 [shape = 'f32[1]{0:T(128)S(6)}', space=smem, size = 0x200, scoped, tag = 'scoped memory for tpu_custom_call.1']
  %s0 = inlined_call_operand.hbm [shape: f32[256,256], index: 0, kind: input, shape index: {}]
  %s1 = inlined_call_operand.hbm [shape: f32[8,256], index: 1, kind: input, shape index: {}]
  %s2 = inlined_call_operand.<no memory space> [shape: f32[1], index: 2, kind: input, shape index: {}]
  %s3 = inlined_call_operand.hbm [shape: f32[8,256], index: 3, kind: output, shape index: {}]
  %s4 = sld [smem:[#allocation0]]
  $region53: #{tpu_custom_call.1} parent=0
    _
  %s6 = ssub.s32 1, %s4
  %s7 = scalar_select 0, %s6, %s4
  %8 = sst [smem:[#allocation2]] %s2
  $region1: #{tpu_custom_call.1} parent=0
    #allocation3 [shape = 'u8[262144]{0}', space=vmem, size = 0x40000, scoped, tag = 'input window, operand 0']
    #allocation4 [shape = 's32[2]{0}', space=sflag, size = 0x8, scoped, tag = 'scoped memory for tpu_custom_call.1']
    #allocation5 [shape = 's32[2]{0}', space=sflag, size = 0x8, scoped, tag = 'scoped memory for tpu_custom_call.1']
    #allocation6 [shape = 'u8[8192]{0}', space=vmem, size = 0x2000, scoped, tag = 'input window, operand 1, single buffered']
    #allocation7 [shape = 's32[1]{0}', space=sflag, size = 0x4, scoped, tag = 'scoped memory for tpu_custom_call.1']
    #allocation8 [shape = 'u8[8192]{0}', space=vmem, size = 0x2000, scoped, tag = 'output window, operand 0']
    %9 = vsyncpa [#allocation4], 0
    %s10 = scalar_lea.sflag [#allocation4], 1
    %11 = vsyncpa %s10, 0
    %12 = vsyncpa [#allocation7], 0
    %13 = vsyncpa [#allocation5], 0
    %s14 = scalar_lea.sflag [#allocation5], 1
    %15 = vsyncpa %s14, 0
    loop: start=0, step=1, limit=4
    $region2: #{tpu_custom_call.1} parent=1 // loop_pre_header
      _
    $region3: #{tpu_custom_call.1} parent=1 // loop_header
      %s17 = sphi 0, %s21
      %p18 = scmp.ge.s32.totalorder %s17, 4
      %s27 = sphi 0, %s29
      %s30 = sphi 0, %s27
      %s31 = sphi 0, %s30
      %s47 = sphi 0, %s31
      %s51 = sphi 0, %s51
      %s53 = sphi 0, %s51
      %s54 = sphi 0, %s53
      %s68 = sphi 0, %s54
      %s72 = sphi 0, %s72
      %s74 = sphi 0, %s72
      %s75 = sphi 0, %s74
      %s89 = sphi 0, %s75
      %s95 = sphi 0, %s97
      %s98 = sphi 0, %s95
      %s99 = sphi 0, %s98
      %s115 = sphi 0, %s99
    $region4: #{tpu_custom_call.1} parent=1 // loop_header_branch
      %20 = sbr.rel (%p18) target = $region8
    $region5: #{tpu_custom_call.1} parent=1 // loop_body
      %s22 = ssub.s32 %s17, 1
      %s23 = ssub.s32 %s17, 2
      %s24 = sadd.s32 %s17, 1
      %s25 = ssub.s32 %s17, %s24
      %p26 = scmp.eq.s32.totalorder %s25, 0
      %s28 = sadd.s32 %s27, 1
      %s29 = scalar_select %p26, %s27, %s28
      %p32 = pneg %p26
      %p33 = scmp.eq.s32.totalorder %s17, 1
      %p34 = por %p32, %p33
      %p35 = scmp.ne.s32.totalorder %s27, %s30
      %p36 = scmp.eq.s32.totalorder %s17, 0
      %p37 = por %p35, %p36
      %p38 = scmp.ne.s32.totalorder %s27, %s30
      %p39 = scmp.eq.s32.totalorder %s22, 1
      %p40 = por %p38, %p39
      %p41 = scmp.ne.s32.totalorder %s30, %s31
      %p42 = scmp.eq.s32.totalorder %s22, 0
      %p43 = por %p41, %p42
      %p44 = scmp.ne.s32.totalorder %s30, %s31
      %p45 = scmp.eq.s32.totalorder %s23, 1
      %p46 = por %p44, %p45
      %p48 = scmp.ne.s32.totalorder %s31, %s47
      %p49 = scmp.eq.s32.totalorder %s23, 0
      %p50 = por %p48, %p49
      %s52 = sadd.s32 %s51, 1
      %p55 = scmp.eq.s32.totalorder %s17, 1
      %p56 = scmp.ne.s32.totalorder %s51, %s53
      %p57 = scmp.eq.s32.totalorder %s17, 0
      %p58 = por %p56, %p57
      %p59 = scmp.ne.s32.totalorder %s51, %s53
      %p60 = scmp.eq.s32.totalorder %s22, 1
      %p61 = por %p59, %p60
      %p62 = scmp.ne.s32.totalorder %s53, %s54
      %p63 = scmp.eq.s32.totalorder %s22, 0
      %p64 = por %p62, %p63
      %p65 = scmp.ne.s32.totalorder %s53, %s54
      %p66 = scmp.eq.s32.totalorder %s23, 1
      %p67 = por %p65, %p66
      %p69 = scmp.ne.s32.totalorder %s54, %s68
      %p70 = scmp.eq.s32.totalorder %s23, 0
      %p71 = por %p69, %p70
      %s73 = sadd.s32 %s72, 1
      %p76 = scmp.eq.s32.totalorder %s17, 1
      %p77 = scmp.ne.s32.totalorder %s72, %s74
      %p78 = scmp.eq.s32.totalorder %s17, 0
      %p79 = por %p77, %p78
      %p80 = scmp.ne.s32.totalorder %s72, %s74
      %p81 = scmp.eq.s32.totalorder %s22, 1
      %p82 = por %p80, %p81
      %p83 = scmp.ne.s32.totalorder %s74, %s75
      %p84 = scmp.eq.s32.totalorder %s22, 0
      %p85 = por %p83, %p84
      %p86 = scmp.ne.s32.totalorder %s74, %s75
      %p87 = scmp.eq.s32.totalorder %s23, 1
      %p88 = por %p86, %p87
      %p90 = scmp.ne.s32.totalorder %s75, %s89
      %p91 = scmp.eq.s32.totalorder %s23, 0
      %p92 = por %p90, %p91
      %s93 = ssub.s32 %s17, %s24
      %p94 = scmp.eq.s32.totalorder %s93, 0
      %s96 = sadd.s32 %s95, 1
      %s97 = scalar_select %p94, %s95, %s96
      %p100 = pneg %p94
      %p101 = scmp.eq.s32.totalorder %s17, 1
      %p102 = por %p100, %p101
      %p103 = scmp.ne.s32.totalorder %s95, %s98
      %p104 = scmp.eq.s32.totalorder %s17, 0
      %p105 = por %p103, %p104
      %p106 = scmp.ne.s32.totalorder %s95, %s98
      %p107 = scmp.eq.s32.totalorder %s22, 1
      %p108 = por %p106, %p107
      %p109 = scmp.ne.s32.totalorder %s98, %s99
      %p110 = scmp.eq.s32.totalorder %s22, 0
      %p111 = por %p109, %p110
      %p112 = scmp.ne.s32.totalorder %s98, %s99
      %p113 = scmp.eq.s32.totalorder %s23, 1
      %p114 = por %p112, %p113
      %p116 = scmp.ne.s32.totalorder %s99, %s115
      %p117 = scmp.eq.s32.totalorder %s23, 0
      %p118 = por %p116, %p117
      %p119 = scmp.le.s32.totalorder 1, %s17
      %p120 = scmp.lt.s32.totalorder %s17, 3
      %p121 = pnand %p119, %p120
      %p122 = pneg %p121
      // Predicated region
      $region9: #{tpu_custom_call.1} parent=5 // pred_check
        _
      $region10: #{tpu_custom_call.1} parent=5 // pred_check_branch
        %124 = sbr.rel (%p121) target = $region12
      $region11: #{tpu_custom_call.1} parent=5 // pred_region
        %s125 = ssub.s32 %s17, 1
        // Predicated region
        $region13: #{tpu_custom_call.1} parent=11 // pred_check
          %p126 = pneg %p64
        $region14: #{tpu_custom_call.1} parent=11 // pred_check_branch
          %128 = sbr.rel (%p126) target = $region16
        $region15: #{tpu_custom_call.1} parent=11 // pred_region
          %s130 = ssub.s32 256, 256
          %131 = vsyncadd [#allocation7], %s130
          %s133 = sshll.u32 [#allocation6], 4
          %s134 = int_to_ptr.vmem [resolvable:$true] %s133
          %136 = dma.hbm_to_vmem [thread:$0]  %s1, 256, %s134, [#allocation7]
        $region16: #{tpu_custom_call.1} parent=11 // pred_fallthru
          _
        // Predicated region
        $region17: #{tpu_custom_call.1} parent=11 // pred_check
          %p137 = pneg %p85
        $region18: #{tpu_custom_call.1} parent=11 // pred_check_branch
          %139 = sbr.rel (%p137) target = $region20
        $region19: #{tpu_custom_call.1} parent=11 // pred_region
          _
        $region20: #{tpu_custom_call.1} parent=11 // pred_fallthru
          _
      $region12: #{tpu_custom_call.1} parent=5 // pred_fallthru
        _
      %p140 = scmp.lt.s32.totalorder %s17, 2
      // Predicated region
      $region21: #{tpu_custom_call.1} parent=5 // pred_check
        %p141 = pneg %p140
      $region22: #{tpu_custom_call.1} parent=5 // pred_check_branch
        %143 = sbr.rel (%p141) target = $region24
      $region23: #{tpu_custom_call.1} parent=5 // pred_region
        // Predicated region
        $region25: #{tpu_custom_call.1} parent=23 // pred_check
          %p144 = pneg %p37
        $region26: #{tpu_custom_call.1} parent=23 // pred_check_branch
          %146 = sbr.rel (%p144) target = $region28
        $region27: #{tpu_custom_call.1} parent=23 // pred_region
          %s147 = sand.u32 %s27, 1
          %s148 = scalar_lea.sflag [#allocation4], %s147
          %s149 = sand.u32 %s27, 1
          %s150 = smul.addr %s149, 256
          %s151 = scalar_lea.vmem [#allocation3], %s150
          %s152 = smul.u32 16, %s17
          %s154 = ssub.s32 4096, 4096
          %155 = vsyncadd %s148, %s154
          %s156 = smul.addr %s152, 2
          %s157 = smul.addr %s156, 128
          %s158 = scalar_lea.hbm %s0, %s157
          %s159 = sshll.u32 %s151, 4
          %s160 = int_to_ptr.vmem [resolvable:$true] %s159
          %165 = dma.hbm_to_vmem [thread:$0]  %s158, 4096, %s160, %s148, 256, 256, 16
        $region28: #{tpu_custom_call.1} parent=23 // pred_fallthru
          _
      $region24: #{tpu_custom_call.1} parent=5 // pred_fallthru
        _
      %p166 = scmp.le.s32.totalorder 1, %s17
      %p167 = scmp.lt.s32.totalorder %s17, 3
      %p168 = pnand %p166, %p167
      %p169 = pneg %p168
      // Predicated region
      $region29: #{tpu_custom_call.1} parent=5 // pred_check
        _
      $region30: #{tpu_custom_call.1} parent=5 // pred_check_branch
        %171 = sbr.rel (%p168) target = $region32
      $region31: #{tpu_custom_call.1} parent=5 // pred_region
        %s172 = ssub.s32 %s17, 1
        %s173 = sand.u32 %s30, 1
        %s174 = scalar_lea.sflag [#allocation4], %s173
        %s175 = sand.u32 %s30, 1
        %s176 = smul.addr %s175, 256
        %s177 = scalar_lea.vmem [#allocation3], %s176
        // Predicated region
        $region33: #{tpu_custom_call.1} parent=31 // pred_check
          %p178 = pneg %p43
        $region34: #{tpu_custom_call.1} parent=31 // pred_check_branch
          %180 = sbr.rel (%p178) target = $region36
        $region35: #{tpu_custom_call.1} parent=31 // pred_region
          %181 = dma.done %s174, 4096
        $region36: #{tpu_custom_call.1} parent=31 // pred_fallthru
          _
        // Predicated region
        $region37: #{tpu_custom_call.1} parent=31 // pred_check
          %p182 = pneg %p64
        $region38: #{tpu_custom_call.1} parent=31 // pred_check_branch
          %184 = sbr.rel (%p182) target = $region40
        $region39: #{tpu_custom_call.1} parent=31 // pred_region
          %185 = dma.done [#allocation7], 256
        $region40: #{tpu_custom_call.1} parent=31 // pred_fallthru
          _
        %s186 = sand.u32 %s30, 1
        %s187 = scalar_lea.sflag [#allocation4], %s186
        %s188 = sand.u32 %s30, 1
        %s189 = smul.addr %s188, 256
        %s190 = scalar_lea.vmem [#allocation3], %s189
        %p191 = pneg %p43
        %p192 = pneg %p40
        %p193 = pneg %p64
        %p194 = pneg %p61
        %p195 = pneg %p85
        %p196 = pneg %p82
        %p197 = pneg %p111
        %p198 = pneg %p108
        %s199 = sand.u32 %s98, 1
        %s200 = scalar_lea.sflag [#allocation5], %s199
        %s201 = sand.u32 %s98, 1
        %s202 = smul.addr %s201, 8
        %s203 = scalar_lea.vmem [#allocation8], %s202
        %s204 = smul.u32 16, %s22
        %v205 = vld [vmem:[#allocation6] sm:$0xff]
        %v206 = vld [vmem:[#allocation6 + $0x8] sm:$0xff]
        %v207 = vld [vmem:[%s177] sm:$0xff]
        %v208 = vld [vmem:[%s177 + $0x8] sm:$0xff]
        %v209 = vld [vmem:[%s177 + $0x10] sm:$0xff]
        %v210 = vld [vmem:[%s177 + $0x18] sm:$0xff]
        %v211 = vld [vmem:[%s177 + $0x20] sm:$0xff]
        %v212 = vld [vmem:[%s177 + $0x28] sm:$0xff]
        %v213 = vld [vmem:[%s177 + $0x30] sm:$0xff]
        %v214 = vld [vmem:[%s177 + $0x38] sm:$0xff]
        %v215 = vld [vmem:[%s177 + $0x40] sm:$0xff]
        %v216 = vld [vmem:[%s177 + $0x48] sm:$0xff]
        %v217 = vld [vmem:[%s177 + $0x50] sm:$0xff]
        %v218 = vld [vmem:[%s177 + $0x58] sm:$0xff]
        %v219 = vld [vmem:[%s177 + $0x60] sm:$0xff]
        %v220 = vld [vmem:[%s177 + $0x68] sm:$0xff]
        %v221 = vld [vmem:[%s177 + $0x70] sm:$0xff]
        %v222 = vld [vmem:[%s177 + $0x78] sm:$0xff]
        %v223 = vld [vmem:[%s177 + $0x80] sm:$0xff]
        %v224 = vld [vmem:[%s177 + $0x88] sm:$0xff]
        %v225 = vld [vmem:[%s177 + $0x90] sm:$0xff]
        %v226 = vld [vmem:[%s177 + $0x98] sm:$0xff]
        %v227 = vld [vmem:[%s177 + $0xa0] sm:$0xff]
        %v228 = vld [vmem:[%s177 + $0xa8] sm:$0xff]
        %v229 = vld [vmem:[%s177 + $0xb0] sm:$0xff]
        %v230 = vld [vmem:[%s177 + $0xb8] sm:$0xff]
        %v231 = vld [vmem:[%s177 + $0xc0] sm:$0xff]
        %v232 = vld [vmem:[%s177 + $0xc8] sm:$0xff]
        %v233 = vld [vmem:[%s177 + $0xd0] sm:$0xff]
        %v234 = vld [vmem:[%s177 + $0xd8] sm:$0xff]
        %v235 = vld [vmem:[%s177 + $0xe0] sm:$0xff]
        %v236 = vld [vmem:[%s177 + $0xe8] sm:$0xff]
        %v237 = vld [vmem:[%s177 + $0xf0] sm:$0xff]
        %v238 = vld [vmem:[%s177 + $0xf8] sm:$0xff]
        %s239 = sld [smem:[#allocation2]]
        %v240 = vstv %s239
        %241 = vmatprep.subr.mxu0 %v238
        %242 = vmatpush1.xpose.msra.mxu0 %v237
        %243 = vmatprep.subr.mxu0 %v236
        %244 = vmatpush1.xpose.msra.mxu0 %v235
        %245 = vmatprep.subr.mxu0 %v234
        %246 = vmatpush1.xpose.msra.mxu0 %v233
        %247 = vmatprep.subr.mxu0 %v232
        %248 = vmatpush1.xpose.msra.mxu0 %v231
        %249 = vmatprep.subr.mxu0 %v230
        %250 = vmatpush1.xpose.msra.mxu0 %v229
        %251 = vmatprep.subr.mxu0 %v228
        %252 = vmatpush1.xpose.msra.mxu0 %v227
        %253 = vmatprep.subr.mxu0 %v226
        %254 = vmatpush1.xpose.msra.mxu0 %v225
        %255 = vmatprep.subr.mxu0 %v224
        %256 = vmatpush1.xpose.msra.mxu0 %v223
        %257 = vmatprep.subr.mxu0 %v222
        %258 = vmatpush1.xpose.msra.mxu0 %v221
        %259 = vmatprep.subr.mxu0 %v220
        %260 = vmatpush1.xpose.msra.mxu0 %v219
        %261 = vmatprep.subr.mxu0 %v218
        %262 = vmatpush1.xpose.msra.mxu0 %v217
        %263 = vmatprep.subr.mxu0 %v216
        %264 = vmatpush1.xpose.msra.mxu0 %v215
        %265 = vmatprep.subr.mxu0 %v214
        %266 = vmatpush1.xpose.msra.mxu0 %v213
        %267 = vmatprep.subr.mxu0 %v212
        %268 = vmatpush1.xpose.msra.mxu0 %v211
        %269 = vmatprep.subr.mxu0 %v210
        %270 = vmatpush1.xpose.msra.mxu0 %v209
        %271 = vmatprep.subr.mxu0 %v208
        %272 = vmatpush1.xpose.msra.mxu0 %v207
        %273 = vmatprep.subr.mxu0 0.0
        %274 = vmatpush2.xpose.msra.mxu0 0.0
        %275 = vmatprep.subr.mxu0 0.0
        %276 = vmatpush2.xpose.msra.mxu0 0.0
        %277 = vmatprep.subr.mxu0 0.0
        %278 = vmatpush2.xpose.msra.mxu0 0.0
        %279 = vmatprep.subr.mxu0 0.0
        %280 = vmatpush2.xpose.msra.mxu0 0.0
        %281 = vmatprep.subr.mxu0 0.0
        %282 = vmatpush2.xpose.msra.mxu0 0.0
        %283 = vmatprep.subr.mxu0 0.0
        %284 = vmatpush2.xpose.msra.mxu0 0.0
        %285 = vmatprep.subr.mxu0 0.0
        %286 = vmatpush2.xpose.msra.mxu0 0.0
        %287 = vmatprep.subr.mxu0 0.0
        %288 = vmatpush2.xpose.msra.mxu0 0.0
        %289 = vmatprep.subr.mxu0 0.0
        %290 = vmatpush2.xpose.msra.mxu0 0.0
        %291 = vmatprep.subr.mxu0 0.0
        %292 = vmatpush2.xpose.msra.mxu0 0.0
        %293 = vmatprep.subr.mxu0 0.0
        %294 = vmatpush2.xpose.msra.mxu0 0.0
        %295 = vmatprep.subr.mxu0 0.0
        %296 = vmatpush2.xpose.msra.mxu0 0.0
        %297 = vmatprep.subr.mxu0 0.0
        %298 = vmatpush2.xpose.msra.mxu0 0.0
        %299 = vmatprep.subr.mxu0 0.0
        %300 = vmatpush2.xpose.msra.mxu0 0.0
        %301 = vmatprep.subr.mxu0 0.0
        %302 = vmatpush2.xpose.msra.mxu0 0.0
        %303 = vmatprep.subr.mxu0 0.0
        %304 = vmatpush2.xpose.msra.mxu0 0.0
        %305 = vmatprep.mubr.f32.mxu0 %v206
        %306 = vmatmul.mubr.f32.gmra.mxu0 %v205
        %v307 = vpop.f32.mrf.mxu0
        %v308 = vadd.f32 %v240, %v307
        %v309 = vpop.f32.mrf.mxu0
        %310 = vdwg.mxu0
        %311 = vst [vmem:[%s203] sm:$0xff] %v308
        %s312 = sand.u32 %s98, 1
        %s313 = scalar_lea.sflag [#allocation5], %s312
        %s314 = sand.u32 %s98, 1
        %s315 = smul.addr %s314, 8
        %s316 = scalar_lea.vmem [#allocation8], %s315
        // Predicated region
        $region41: #{tpu_custom_call.1} parent=31 // pred_check
          %p317 = pneg %p108
        $region42: #{tpu_custom_call.1} parent=31 // pred_check_branch
          %319 = sbr.rel (%p317) target = $region44
        $region43: #{tpu_custom_call.1} parent=31 // pred_region
          %s321 = ssub.s32 128, 128
          %322 = vsyncadd %s313, %s321
          %s323 = smul.addr %s22, 128
          %s324 = scalar_lea.hbm %s3, %s323
          %s326 = sshll.u32 %s316, 4
          %s327 = int_to_ptr.vmem [resolvable:$true] %s326
          %329 = dma.vmem_to_hbm [thread:$0]  %s327, 128, %s324, %s313
        $region44: #{tpu_custom_call.1} parent=31 // pred_fallthru
          _
      $region32: #{tpu_custom_call.1} parent=5 // pred_fallthru
        _
      %p330 = scmp.le.s32.totalorder 2, %s17
      // Predicated region
      $region45: #{tpu_custom_call.1} parent=5 // pred_check
        %p331 = pneg %p330
      $region46: #{tpu_custom_call.1} parent=5 // pred_check_branch
        %333 = sbr.rel (%p331) target = $region48
      $region47: #{tpu_custom_call.1} parent=5 // pred_region
        %s334 = ssub.s32 %s17, 2
        // Predicated region
        $region49: #{tpu_custom_call.1} parent=47 // pred_check
          %p335 = pneg %p114
        $region50: #{tpu_custom_call.1} parent=47 // pred_check_branch
          %337 = sbr.rel (%p335) target = $region52
        $region51: #{tpu_custom_call.1} parent=47 // pred_region
          %s338 = sand.u32 %s99, 1
          %s339 = scalar_lea.sflag [#allocation5], %s338
          %s340 = sand.u32 %s99, 1
          %s341 = smul.addr %s340, 8
          %s342 = scalar_lea.vmem [#allocation8], %s341
          %343 = dma.done %s339, 128
        $region52: #{tpu_custom_call.1} parent=47 // pred_fallthru
          _
      $region48: #{tpu_custom_call.1} parent=5 // pred_fallthru
        _
    $region6: #{tpu_custom_call.1} parent=1 // loop_footer
      %s21 = sadd.s32 1, %s17
    $region7: #{tpu_custom_call.1} parent=1 // loop_footer_branch
      %16 = sbr.rel target = $region3
    $region8: #{tpu_custom_call.1} parent=1 // loop_exit
      _
    %344 = vsyncpa [#allocation4], 1
    %s345 = scalar_lea.sflag [#allocation4], 1
    %346 = vsyncpa %s345, 1
    %347 = vsyncpa [#allocation7], 1
    %348 = vsyncpa [#allocation5], 1
    %s349 = scalar_lea.sflag [#allocation5], 1
    %350 = vsyncpa %s349, 1

</llo_original>
